<compile_context>
chip_gen: v5e
topology: v5e:2x2
jax: 0.10.0
libtpu: 0.0.40
codegen_flags: <defaults>
</compile_context>

<pallas_src>
import jax
import jax.numpy as jnp
from jax.experimental import pallas as pl
from jax.experimental.pallas import tpu as pltpu

INPUT_SIZE = 11
HIDDEN_SIZE = 256
OUTPUT_SIZE = 3
OUT_PAD = 8            # output columns: OUTPUT_SIZE rounded up to one f32 sublane word
DEFAULT_TILE_B = 4096  # batch rows per grid step (see vmem_limit_bytes below)
VMEM_LIMIT_BYTES = 40 * 1024 * 1024  # fits the 4096-row tile on v5e/v6e/v7x


def _mlp_kernel(x_ref, w1_ref, b1_ref, w2_ref, b2_ref, w3_ref, b3_ref, o_ref):
    # x arrives f32 from HBM; cast to bf16 only at the MXU boundary.
    x = x_ref[...].astype(w1_ref.dtype)
    # layer 1: bf16 x @ bf16 w1 -> f32 accumulator; bias + ReLU in f32
    h1 = jnp.dot(x, w1_ref[...], preferred_element_type=jnp.float32)
    h1 = jnp.maximum(h1 + b1_ref[...], 0.0)
    # layer 2
    h2 = jnp.dot(h1.astype(w2_ref.dtype), w2_ref[...],
                 preferred_element_type=jnp.float32)
    h2 = jnp.maximum(h2 + b2_ref[...], 0.0)
    # layer 3 (w3/b3 zero-padded 3 -> OUT_PAD columns; extra columns are 0)
    out = jnp.dot(h2.astype(w3_ref.dtype), w3_ref[...],
                  preferred_element_type=jnp.float32)
    o_ref[...] = (out + b3_ref[...]).astype(o_ref.dtype)


def _choose_block_b(batch, tile_b):
    """Batch rows per grid step.

    Multiple of 16 (bf16 sublane packing), never larger than the rounded-up
    batch, and capped so the grid has >= 2 steps when the batch allows it
    (v7x megacore sharding of the "parallel" batch axis).
    """
    tile_b = max(16, (int(tile_b) // 16) * 16)           # round down to mult of 16
    batch_ceil = max(16, ((batch + 15) // 16) * 16)
    block_b = min(tile_b, batch_ceil)
    if batch >= 32 and pl.cdiv(batch, block_b) < 2:      # ensure >= 2 grid steps
        half = ((pl.cdiv(batch, 2) + 15) // 16) * 16
        block_b = min(block_b, max(16, half))
    return block_b


def snake_nn_forward(x, params, *, tile_b=DEFAULT_TILE_B):
    """x: [B, INPUT_SIZE] float32. params from init_params. Returns [B, OUTPUT_SIZE] f32."""
    B = x.shape[0]
    x = x.astype(jnp.float32)          # cast to bf16 happens inside the kernel
    block_b = _choose_block_b(B, tile_b)
    grid = (pl.cdiv(B, block_b),)      # ragged last block handled by Pallas masking

    # x / out tiled over the batch; weights & biases resident across grid steps.
    x_spec = pl.BlockSpec((block_b, INPUT_SIZE), lambda i: (i, 0))
    out_spec = pl.BlockSpec((block_b, OUT_PAD), lambda i: (i, 0))

    def resident(shape):
        return pl.BlockSpec(shape, lambda i: (0, 0))

    out_padded = pl.pallas_call(
        _mlp_kernel,
        out_shape=jax.ShapeDtypeStruct((B, OUT_PAD), jnp.float32),
        grid=grid,
        in_specs=[
            x_spec,
            resident((INPUT_SIZE, HIDDEN_SIZE)),   # w1 (bf16)
            resident((1, HIDDEN_SIZE)),            # b1 (f32)
            resident((HIDDEN_SIZE, HIDDEN_SIZE)),  # w2 (bf16)
            resident((1, HIDDEN_SIZE)),            # b2 (f32)
            resident((HIDDEN_SIZE, OUT_PAD)),      # w3 padded (bf16)
            resident((1, OUT_PAD)),                # b3 padded (f32)
        ],
        out_specs=out_spec,
        compiler_params=pltpu.CompilerParams(
            # batch axis shards across both TensorCores on v7x; harmless elsewhere
            dimension_semantics=("parallel",),
            vmem_limit_bytes=VMEM_LIMIT_BYTES,
        ),
    )(
        x,
        params["w1"], params["b1"],
        params["w2"], params["b2"],
        params["w3"], params["b3"],
    )
    # Drop the zero-padded output columns (only 8 f32 columns ever hit HBM).
    return out_padded[:, :OUTPUT_SIZE]


def init_params(key):
    """Mimics nn.Linear's U(-1/sqrt(fan_in), 1/sqrt(fan_in)) init.

    Weights are stored [fan_in, fan_out] in bf16 (MXU inputs); biases stay f32
    (added in the f32 accumulator). w3/b3 are zero-padded to OUT_PAD columns.
    """
    ks = jax.random.split(key, 6)

    def linear(kw, kb, fan_in, fan_out, pad_to=None):
        bound = 1.0 / jnp.sqrt(jnp.float32(fan_in))
        w = jax.random.uniform(kw, (fan_in, fan_out), jnp.float32, -bound, bound)
        b = jax.random.uniform(kb, (1, fan_out), jnp.float32, -bound, bound)
        if pad_to is not None and pad_to > fan_out:
            w = jnp.pad(w, ((0, 0), (0, pad_to - fan_out)))
            b = jnp.pad(b, ((0, 0), (0, pad_to - fan_out)))
        return w.astype(jnp.bfloat16), b

    w1, b1 = linear(ks[0], ks[1], INPUT_SIZE, HIDDEN_SIZE)
    w2, b2 = linear(ks[2], ks[3], HIDDEN_SIZE, HIDDEN_SIZE)
    w3, b3 = linear(ks[4], ks[5], HIDDEN_SIZE, OUTPUT_SIZE, pad_to=OUT_PAD)
    return {"w1": w1, "b1": b1, "w2": w2, "b2": b2, "w3": w3, "b3": b3}


def _reference_forward(x, p):
    """Pure-JAX reference mimicking bf16 MXU inputs with f32 accumulation."""
    xb = x.astype(jnp.bfloat16).astype(jnp.float32)
    w1 = p["w1"].astype(jnp.float32)
    w2 = p["w2"].astype(jnp.float32)
    w3 = p["w3"].astype(jnp.float32)
    h1 = jnp.maximum(xb @ w1 + p["b1"], 0.0)
    h2 = jnp.maximum(h1.astype(jnp.bfloat16).astype(jnp.float32) @ w2 + p["b2"], 0.0)
    out = h2.astype(jnp.bfloat16).astype(jnp.float32) @ w3 + p["b3"]
    return out[:, :OUTPUT_SIZE]


if __name__ == "__main__":
    key = jax.random.PRNGKey(0)
    k_params, k1, k2, k3 = jax.random.split(key, 4)

    params = init_params(k_params)

    # (1) Tiny batch of game-state feature vectors (batch=2, features=11).
    x = jax.random.normal(k1, (2, INPUT_SIZE), jnp.float32)
    out = jax.block_until_ready(snake_nn_forward(x, params))
    ref = _reference_forward(x, params)
    assert out.shape == (2, OUTPUT_SIZE)
    assert jnp.allclose(out, ref, atol=1e-3, rtol=1e-3)

    # (2) Multi-step grid with a ragged last block (tile_b=16 -> 3 grid steps).
    x2 = jax.random.normal(k2, (40, INPUT_SIZE), jnp.float32)
    out2 = jax.block_until_ready(snake_nn_forward(x2, params, tile_b=16))
    ref2 = _reference_forward(x2, params)
    assert out2.shape == (40, OUTPUT_SIZE)
    assert jnp.allclose(out2, ref2, atol=1e-3, rtol=1e-3)

    # (3) Default tile: block_b auto-splits to give a 2-step (megacore) grid
    #     with a masked ragged tail (block_b=64, rows 100..127 out of bounds).
    x3 = jax.random.normal(k3, (100, INPUT_SIZE), jnp.float32)
    out3 = jax.block_until_ready(snake_nn_forward(x3, params))
    ref3 = _reference_forward(x3, params)
    assert out3.shape == (100, OUTPUT_SIZE)
    assert jnp.allclose(out3, ref3, atol=1e-3, rtol=1e-3)

    print("KERNEL_OK")
</pallas_src>

<mosaic_0001>
module attributes {stable_mosaic.version = 11 : i64} {
  func.func @_mlp_kernel(%arg0: i32, %arg1: memref<16x11xf32, #tpu.memory_space<vmem>>, %arg2: memref<11x256xbf16, #tpu.memory_space<vmem>>, %arg3: memref<1x256xf32, #tpu.memory_space<vmem>>, %arg4: memref<256x256xbf16, #tpu.memory_space<vmem>>, %arg5: memref<1x256xf32, #tpu.memory_space<vmem>>, %arg6: memref<256x8xbf16, #tpu.memory_space<vmem>>, %arg7: memref<1x8xf32, #tpu.memory_space<vmem>>, %arg8: memref<16x8xf32, #tpu.memory_space<vmem>>) attributes {dimension_semantics = [#tpu.dimension_semantics<parallel>], iteration_bounds = array<i64: 1>, scalar_prefetch = 0 : i64, scratch_operands = 0 : i64, tpu.core_type = #tpu.core_type<tc>, window_params = [{transform_indices = @transform_0, window_bounds = array<i64: 16, 11>}, {pipeline_mode = #tpu.pipeline_mode<synchronous>, transform_indices = @transform_1, window_bounds = array<i64: 11, 256>}, {pipeline_mode = #tpu.pipeline_mode<synchronous>, transform_indices = @transform_2, window_bounds = array<i64: 1, 256>}, {pipeline_mode = #tpu.pipeline_mode<synchronous>, transform_indices = @transform_3, window_bounds = array<i64: 256, 256>}, {pipeline_mode = #tpu.pipeline_mode<synchronous>, transform_indices = @transform_4, window_bounds = array<i64: 1, 256>}, {pipeline_mode = #tpu.pipeline_mode<synchronous>, transform_indices = @transform_5, window_bounds = array<i64: 256, 8>}, {pipeline_mode = #tpu.pipeline_mode<synchronous>, transform_indices = @transform_6, window_bounds = array<i64: 1, 8>}, {transform_indices = @transform_7, window_bounds = array<i64: 16, 8>}]} {
    %c0 = arith.constant 0 : index
    %c0_0 = arith.constant 0 : index
    %0 = vector.load %arg1[%c0, %c0_0] : memref<16x11xf32, #tpu.memory_space<vmem>>, vector<16x11xf32>
    %1 = arith.truncf %0 : vector<16x11xf32> to vector<16x11xbf16>
    %c0_1 = arith.constant 0 : index
    %c0_2 = arith.constant 0 : index
    %2 = vector.load %arg2[%c0_1, %c0_2] : memref<11x256xbf16, #tpu.memory_space<vmem>>, vector<11x256xbf16>
    %cst = arith.constant dense<0.000000e+00> : vector<16x256xf32>
    %3 = tpu.matmul %1, %2, %cst {dimension_numbers = #tpu.dot_dimension_numbers<[1], [0], [0], [1], [0, 0, 1, 1], [], []>} : vector<16x11xbf16>, vector<11x256xbf16>, vector<16x256xf32> -> vector<16x256xf32>
    %c0_3 = arith.constant 0 : index
    %c0_4 = arith.constant 0 : index
    %4 = vector.load %arg3[%c0_3, %c0_4] : memref<1x256xf32, #tpu.memory_space<vmem>>, vector<1x256xf32>
    %5 = vector.broadcast %4 : vector<1x256xf32> to vector<16x256xf32>
    %6 = arith.addf %3, %5 : vector<16x256xf32>
    %cst_5 = arith.constant 0.000000e+00 : f32
    %7 = vector.broadcast %cst_5 : f32 to vector<16x256xf32>
    %8 = arith.maximumf %6, %7 : vector<16x256xf32>
    %9 = arith.truncf %8 : vector<16x256xf32> to vector<16x256xbf16>
    %c0_6 = arith.constant 0 : index
    %c0_7 = arith.constant 0 : index
    %10 = vector.load %arg4[%c0_6, %c0_7] : memref<256x256xbf16, #tpu.memory_space<vmem>>, vector<256x256xbf16>
    %cst_8 = arith.constant dense<0.000000e+00> : vector<16x256xf32>
    %11 = tpu.matmul %9, %10, %cst_8 {dimension_numbers = #tpu.dot_dimension_numbers<[1], [0], [0], [1], [0, 0, 1, 1], [], []>} : vector<16x256xbf16>, vector<256x256xbf16>, vector<16x256xf32> -> vector<16x256xf32>
    %c0_9 = arith.constant 0 : index
    %c0_10 = arith.constant 0 : index
    %12 = vector.load %arg5[%c0_9, %c0_10] : memref<1x256xf32, #tpu.memory_space<vmem>>, vector<1x256xf32>
    %13 = vector.broadcast %12 : vector<1x256xf32> to vector<16x256xf32>
    %14 = arith.addf %11, %13 : vector<16x256xf32>
    %cst_11 = arith.constant 0.000000e+00 : f32
    %15 = vector.broadcast %cst_11 : f32 to vector<16x256xf32>
    %16 = arith.maximumf %14, %15 : vector<16x256xf32>
    %17 = arith.truncf %16 : vector<16x256xf32> to vector<16x256xbf16>
    %c0_12 = arith.constant 0 : index
    %c0_13 = arith.constant 0 : index
    %18 = vector.load %arg6[%c0_12, %c0_13] : memref<256x8xbf16, #tpu.memory_space<vmem>>, vector<256x8xbf16>
    %cst_14 = arith.constant dense<0.000000e+00> : vector<16x8xf32>
    %19 = tpu.matmul %17, %18, %cst_14 {dimension_numbers = #tpu.dot_dimension_numbers<[1], [0], [0], [1], [0, 0, 1, 1], [], []>} : vector<16x256xbf16>, vector<256x8xbf16>, vector<16x8xf32> -> vector<16x8xf32>
    %c0_15 = arith.constant 0 : index
    %c0_16 = arith.constant 0 : index
    %20 = vector.load %arg7[%c0_15, %c0_16] : memref<1x8xf32, #tpu.memory_space<vmem>>, vector<1x8xf32>
    %21 = vector.broadcast %20 : vector<1x8xf32> to vector<16x8xf32>
    %22 = arith.addf %19, %21 : vector<16x8xf32>
    %c0_17 = arith.constant 0 : index
    %c0_18 = arith.constant 0 : index
    %23 = vector.load %arg8[%c0_17, %c0_18] : memref<16x8xf32, #tpu.memory_space<vmem>>, vector<16x8xf32>
    tpu.vector_store %arg8[%c0_17, %c0_18], %22 {strides = array<i32>} : memref<16x8xf32, #tpu.memory_space<vmem>>, vector<16x8xf32>,
    return
  }
  func.func @transform_0(%arg0: i32) -> (i32, i32) {
    %c0_i32 = arith.constant 0 : i32
    %c0_i32_0 = arith.constant 0 : i32
    return %arg0, %c0_i32 : i32, i32
  }
  func.func @transform_1(%arg0: i32) -> (i32, i32) {
    %c0_i32 = arith.constant 0 : i32
    %c0_i32_0 = arith.constant 0 : i32
    %c0_i32_1 = arith.constant 0 : i32
    return %c0_i32, %c0_i32_0 : i32, i32
  }
  func.func @transform_2(%arg0: i32) -> (i32, i32) {
    %c0_i32 = arith.constant 0 : i32
    %c0_i32_0 = arith.constant 0 : i32
    %c0_i32_1 = arith.constant 0 : i32
    return %c0_i32, %c0_i32_0 : i32, i32
  }
  func.func @transform_3(%arg0: i32) -> (i32, i32) {
    %c0_i32 = arith.constant 0 : i32
    %c0_i32_0 = arith.constant 0 : i32
    %c0_i32_1 = arith.constant 0 : i32
    return %c0_i32, %c0_i32_0 : i32, i32
  }
  func.func @transform_4(%arg0: i32) -> (i32, i32) {
    %c0_i32 = arith.constant 0 : i32
    %c0_i32_0 = arith.constant 0 : i32
    %c0_i32_1 = arith.constant 0 : i32
    return %c0_i32, %c0_i32_0 : i32, i32
  }
  func.func @transform_5(%arg0: i32) -> (i32, i32) {
    %c0_i32 = arith.constant 0 : i32
    %c0_i32_0 = arith.constant 0 : i32
    %c0_i32_1 = arith.constant 0 : i32
    return %c0_i32, %c0_i32_0 : i32, i32
  }
  func.func @transform_6(%arg0: i32) -> (i32, i32) {
    %c0_i32 = arith.constant 0 : i32
    %c0_i32_0 = arith.constant 0 : i32
    %c0_i32_1 = arith.constant 0 : i32
    return %c0_i32, %c0_i32_0 : i32, i32
  }
  func.func @transform_7(%arg0: i32) -> (i32, i32) {
    %c0_i32 = arith.constant 0 : i32
    %c0_i32_0 = arith.constant 0 : i32
    return %arg0, %c0_i32 : i32, i32
  }
}

</mosaic_0001>

<llo_original>
// kernel: tpu_custom_call.1
$region0: #{tpu_custom_call.1}
  #allocation0 [shape = 'u32[]', space=smem, size = 0x4, offset = 0x4, fixed_abs, tag = 'smem constant byte address 0x4 - core index']
  #allocation1 [shape = 'u32[72,128]{1,0:T(1,128)}', space=vmem, size = 0x9000, scoped, tag = 'internal scratch']
  %s0 = inlined_call_operand.vmem [shape: f32[2,11], index: 0, kind: input, shape index: {}]
  %s1 = inlined_call_operand.vmem [shape: bf16[11,256], index: 1, kind: input, shape index: {}]
  %s2 = inlined_call_operand.vmem [shape: f32[1,256], index: 2, kind: input, shape index: {}]
  %s3 = inlined_call_operand.hbm [shape: bf16[256,256], index: 3, kind: input, shape index: {}]
  %s4 = inlined_call_operand.vmem [shape: f32[1,256], index: 4, kind: input, shape index: {}]
  %s5 = inlined_call_operand.vmem [shape: bf16[256,8], index: 5, kind: input, shape index: {}]
  %s6 = inlined_call_operand.vmem [shape: f32[1,8], index: 6, kind: input, shape index: {}]
  %s7 = inlined_call_operand.hbm [shape: f32[2,8], index: 7, kind: output, shape index: {}]
  %s8 = sld [smem:[#allocation0]]
  $region42: #{tpu_custom_call.1} parent=0
    _
  %s10 = ssub.s32 1, %s8
  %s11 = scalar_select 0, %s10, %s8
  $region1: #{tpu_custom_call.1} parent=0
    #allocation2 [shape = 'u8[131072]{0}', space=vmem, size = 0x20000, scoped, tag = 'input window, operand 3, single buffered']
    #allocation3 [shape = 's32[1]{0}', space=sflag, size = 0x4, scoped, tag = 'scoped memory for tpu_custom_call.1']
    #allocation4 [shape = 's32[1]{0}', space=sflag, size = 0x4, scoped, tag = 'scoped memory for tpu_custom_call.1']
    #allocation5 [shape = 'u8[8192]{0}', space=vmem, size = 0x2000, scoped, tag = 'output window, operand 0, single buffered']
    %12 = vsyncpa [#allocation3], 0
    %13 = vsyncpa [#allocation4], 0
    // Predicated region
    $region2: #{tpu_custom_call.1} parent=1 // pred_check
      _
    $region3: #{tpu_custom_call.1} parent=1 // pred_check_branch
      %15 = sbr.rel (0) target = $region5
    $region4: #{tpu_custom_call.1} parent=1 // pred_region
      _
    $region5: #{tpu_custom_call.1} parent=1 // pred_fallthru
      _
    // Predicated region
    $region6: #{tpu_custom_call.1} parent=1 // pred_check
      _
    $region7: #{tpu_custom_call.1} parent=1 // pred_check_branch
      %17 = sbr.rel (0) target = $region9
    $region8: #{tpu_custom_call.1} parent=1 // pred_region
      _
    $region9: #{tpu_custom_call.1} parent=1 // pred_fallthru
      _
    // Predicated region
    $region10: #{tpu_custom_call.1} parent=1 // pred_check
      _
    $region11: #{tpu_custom_call.1} parent=1 // pred_check_branch
      %19 = sbr.rel (0) target = $region13
    $region12: #{tpu_custom_call.1} parent=1 // pred_region
      _
    $region13: #{tpu_custom_call.1} parent=1 // pred_fallthru
      _
    // Predicated region
    $region14: #{tpu_custom_call.1} parent=1 // pred_check
      _
    $region15: #{tpu_custom_call.1} parent=1 // pred_check_branch
      %21 = sbr.rel (0) target = $region17
    $region16: #{tpu_custom_call.1} parent=1 // pred_region
      %23 = vsyncadd [#allocation3], 0
      %s24 = sshll.u32 %s3, 4
      %s25 = int_to_ptr.hbm [resolvable:$true] %s24
      %s26 = sshll.u32 [#allocation2], 4
      %s27 = int_to_ptr.vmem [resolvable:$true] %s26
      %32 = dma.hbm_to_vmem [thread:$0]  %s25, 4096, %s27, [#allocation3], 128, 128, 8
    $region17: #{tpu_custom_call.1} parent=1 // pred_fallthru
      _
    // Predicated region
    $region18: #{tpu_custom_call.1} parent=1 // pred_check
      _
    $region19: #{tpu_custom_call.1} parent=1 // pred_check_branch
      %34 = sbr.rel (0) target = $region21
    $region20: #{tpu_custom_call.1} parent=1 // pred_region
      _
    $region21: #{tpu_custom_call.1} parent=1 // pred_fallthru
      _
    // Predicated region
    $region22: #{tpu_custom_call.1} parent=1 // pred_check
      _
    $region23: #{tpu_custom_call.1} parent=1 // pred_check_branch
      %36 = sbr.rel (0) target = $region25
    $region24: #{tpu_custom_call.1} parent=1 // pred_region
      _
    $region25: #{tpu_custom_call.1} parent=1 // pred_fallthru
      _
    // Predicated region
    $region26: #{tpu_custom_call.1} parent=1 // pred_check
      _
    $region27: #{tpu_custom_call.1} parent=1 // pred_check_branch
      %38 = sbr.rel (0) target = $region29
    $region28: #{tpu_custom_call.1} parent=1 // pred_region
      _
    $region29: #{tpu_custom_call.1} parent=1 // pred_fallthru
      _
    // Predicated region
    $region30: #{tpu_custom_call.1} parent=1 // pred_check
      _
    $region31: #{tpu_custom_call.1} parent=1 // pred_check_branch
      %40 = sbr.rel (0) target = $region33
    $region32: #{tpu_custom_call.1} parent=1 // pred_region
      %42 = dma.done [#allocation3], 4096
    $region33: #{tpu_custom_call.1} parent=1 // pred_fallthru
      _
    %v44 = vld [vmem:[%s0] sm:$0xff]
    %v45 = vld [vmem:[%s0 + $0x8] sm:$0xff]
    %v46 = vpack.c.bf16 %v45, %v44
    %v47 = vld [vmem:[%s1] sm:$0xff]
    %v48 = vld [vmem:[%s1 + $0x8] sm:$0x33]
    %v49 = vld [vmem:[%s2] sm:$0x3]
    %v51 = vperm.slane %v49, 0
    %v52 = vperm.slane %v49, 1
    %v57 = vunpack.c.l.b16 %v47
    %v58 = vunpack.c.h.b16 %v47
    %v59 = vunpack.c.l.b16 %v48
    %v60 = vunpack.c.h.b16 %v48
    %v61 = vpack.c.b16 %v59, %v57
    %v62 = vpack.c.b16 %v60, %v58
    %vm63 = vcmask 89088
    %v65 = vsel %vm63, %v46, 0
    %vm67 = vcmask 1044480
    %vm68 = vcmask 1045504
    %v69 = vsel %vm67, 4294967295, 65535
    %v70 = vsel %vm68, %v69, 0
    %v72 = vand.u32 %v61, %v70
    %v75 = vand.u32 %v62, %v70
    %77 = vmatpush.bf16.msra.mxu0 0
    %78 = vmatpush.bf16.msra.mxu0 0
    %79 = vmatpush.bf16.msra.mxu0 0
    %80 = vmatpush.bf16.msra.mxu0 0
    %81 = vmatpush.bf16.msra.mxu0 0
    %82 = vmatpush.bf16.msra.mxu0 0
    %83 = vmatpush.bf16.msra.mxu0 0
    %84 = vmatpush.bf16.msra.mxu0 %v72
    %85 = vmatmul.bf16.gmra.mxu0 %v65
    %v86 = vpop.f32.mrf.mxu0
    %v87 = vadd.f32 %v51, %v86
    %v88 = vpop.f32.mrf.mxu0
    %v89 = vadd.f32 %v51, %v88
    %90 = vdwg.mxu0
    %91 = vmatpush.bf16.msra.mxu0 0
    %92 = vmatpush.bf16.msra.mxu0 0
    %93 = vmatpush.bf16.msra.mxu0 0
    %94 = vmatpush.bf16.msra.mxu0 0
    %95 = vmatpush.bf16.msra.mxu0 0
    %96 = vmatpush.bf16.msra.mxu0 0
    %97 = vmatpush.bf16.msra.mxu0 0
    %98 = vmatpush.bf16.msra.mxu0 %v75
    %99 = vmatmul.bf16.gmra.mxu0 %v65
    %v100 = vpop.f32.mrf.mxu0
    %v101 = vadd.f32 %v52, %v100
    %v102 = vpop.f32.mrf.mxu0
    %v103 = vadd.f32 %v52, %v102
    %104 = vdwg.mxu0
    %v105 = vmax.f32 %v87, 0.0
    %v106 = vmax.f32 %v101, 0.0
    %v107 = vmax.f32 %v89, 0.0
    %v108 = vmax.f32 %v103, 0.0
    %v109 = vpack.c.bf16 %v107, %v105
    %v110 = vpack.c.bf16 %v108, %v106
    %v111 = vld [vmem:[#allocation2] sm:$0xff]
    %v112 = vld [vmem:[#allocation2 + $0x8] sm:$0xff]
    %v113 = vld [vmem:[#allocation2 + $0x10] sm:$0xff]
    %v114 = vld [vmem:[#allocation2 + $0x18] sm:$0xff]
    %v115 = vld [vmem:[#allocation2 + $0x20] sm:$0xff]
    %v116 = vld [vmem:[#allocation2 + $0x28] sm:$0xff]
    %v117 = vld [vmem:[#allocation2 + $0x30] sm:$0xff]
    %v118 = vld [vmem:[#allocation2 + $0x38] sm:$0xff]
    %v119 = vld [vmem:[#allocation2 + $0x40] sm:$0xff]
    %v120 = vld [vmem:[#allocation2 + $0x48] sm:$0xff]
    %v121 = vld [vmem:[#allocation2 + $0x50] sm:$0xff]
    %v122 = vld [vmem:[#allocation2 + $0x58] sm:$0xff]
    %v123 = vld [vmem:[#allocation2 + $0x60] sm:$0xff]
    %v124 = vld [vmem:[#allocation2 + $0x68] sm:$0xff]
    %v125 = vld [vmem:[#allocation2 + $0x70] sm:$0xff]
    %v126 = vld [vmem:[#allocation2 + $0x78] sm:$0xff]
    %v127 = vld [vmem:[#allocation2 + $0x80] sm:$0xff]
    %v128 = vld [vmem:[#allocation2 + $0x88] sm:$0xff]
    %v129 = vld [vmem:[#allocation2 + $0x90] sm:$0xff]
    %v130 = vld [vmem:[#allocation2 + $0x98] sm:$0xff]
    %v131 = vld [vmem:[#allocation2 + $0xa0] sm:$0xff]
    %v132 = vld [vmem:[#allocation2 + $0xa8] sm:$0xff]
    %v133 = vld [vmem:[#allocation2 + $0xb0] sm:$0xff]
    %v134 = vld [vmem:[#allocation2 + $0xb8] sm:$0xff]
    %v135 = vld [vmem:[#allocation2 + $0xc0] sm:$0xff]
    %v136 = vld [vmem:[#allocation2 + $0xc8] sm:$0xff]
    %v137 = vld [vmem:[#allocation2 + $0xd0] sm:$0xff]
    %v138 = vld [vmem:[#allocation2 + $0xd8] sm:$0xff]
    %v139 = vld [vmem:[#allocation2 + $0xe0] sm:$0xff]
    %v140 = vld [vmem:[#allocation2 + $0xe8] sm:$0xff]
    %v141 = vld [vmem:[#allocation2 + $0xf0] sm:$0xff]
    %v142 = vld [vmem:[#allocation2 + $0xf8] sm:$0xff]
    %v143 = vld [vmem:[%s4] sm:$0x3]
    %v145 = vperm.slane %v143, 0
    %v146 = vperm.slane %v143, 1
    %v181 = vunpack.c.l.b16 %v111
    %v182 = vunpack.c.h.b16 %v111
    %v183 = vunpack.c.l.b16 %v112
    %v184 = vunpack.c.h.b16 %v112
    %v185 = vunpack.c.l.b16 %v113
    %v186 = vunpack.c.h.b16 %v113
    %v187 = vunpack.c.l.b16 %v114
    %v188 = vunpack.c.h.b16 %v114
    %v189 = vunpack.c.l.b16 %v115
    %v190 = vunpack.c.h.b16 %v115
    %v191 = vunpack.c.l.b16 %v116
    %v192 = vunpack.c.h.b16 %v116
    %v193 = vunpack.c.l.b16 %v117
    %v194 = vunpack.c.h.b16 %v117
    %v195 = vunpack.c.l.b16 %v118
    %v196 = vunpack.c.h.b16 %v118
    %v197 = vunpack.c.l.b16 %v119
    %v198 = vunpack.c.h.b16 %v119
    %v199 = vunpack.c.l.b16 %v120
    %v200 = vunpack.c.h.b16 %v120
    %v201 = vunpack.c.l.b16 %v121
    %v202 = vunpack.c.h.b16 %v121
    %v203 = vunpack.c.l.b16 %v122
    %v204 = vunpack.c.h.b16 %v122
    %v205 = vunpack.c.l.b16 %v123
    %v206 = vunpack.c.h.b16 %v123
    %v207 = vunpack.c.l.b16 %v124
    %v208 = vunpack.c.h.b16 %v124
    %v209 = vunpack.c.l.b16 %v125
    %v210 = vunpack.c.h.b16 %v125
    %v211 = vunpack.c.l.b16 %v126
    %v212 = vunpack.c.h.b16 %v126
    %v213 = vunpack.c.l.b16 %v127
    %v214 = vunpack.c.h.b16 %v127
    %v215 = vunpack.c.l.b16 %v128
    %v216 = vunpack.c.h.b16 %v128
    %v217 = vunpack.c.l.b16 %v129
    %v218 = vunpack.c.h.b16 %v129
    %v219 = vunpack.c.l.b16 %v130
    %v220 = vunpack.c.h.b16 %v130
    %v221 = vunpack.c.l.b16 %v131
    %v222 = vunpack.c.h.b16 %v131
    %v223 = vunpack.c.l.b16 %v132
    %v224 = vunpack.c.h.b16 %v132
    %v225 = vunpack.c.l.b16 %v133
    %v226 = vunpack.c.h.b16 %v133
    %v227 = vunpack.c.l.b16 %v134
    %v228 = vunpack.c.h.b16 %v134
    %v229 = vunpack.c.l.b16 %v135
    %v230 = vunpack.c.h.b16 %v135
    %v231 = vunpack.c.l.b16 %v136
    %v232 = vunpack.c.h.b16 %v136
    %v233 = vunpack.c.l.b16 %v137
    %v234 = vunpack.c.h.b16 %v137
    %v235 = vunpack.c.l.b16 %v138
    %v236 = vunpack.c.h.b16 %v138
    %v237 = vunpack.c.l.b16 %v139
    %v238 = vunpack.c.h.b16 %v139
    %v239 = vunpack.c.l.b16 %v140
    %v240 = vunpack.c.h.b16 %v140
    %v241 = vunpack.c.l.b16 %v141
    %v242 = vunpack.c.h.b16 %v141
    %v243 = vunpack.c.l.b16 %v142
    %v244 = vunpack.c.h.b16 %v142
    %v245 = vpack.c.b16 %v183, %v181
    %v246 = vpack.c.b16 %v184, %v182
    %v247 = vpack.c.b16 %v187, %v185
    %v248 = vpack.c.b16 %v188, %v186
    %v249 = vpack.c.b16 %v191, %v189
    %v250 = vpack.c.b16 %v192, %v190
    %v251 = vpack.c.b16 %v195, %v193
    %v252 = vpack.c.b16 %v196, %v194
    %v253 = vpack.c.b16 %v199, %v197
    %v254 = vpack.c.b16 %v200, %v198
    %v255 = vpack.c.b16 %v203, %v201
    %v256 = vpack.c.b16 %v204, %v202
    %v257 = vpack.c.b16 %v207, %v205
    %v258 = vpack.c.b16 %v208, %v206
    %v259 = vpack.c.b16 %v211, %v209
    %v260 = vpack.c.b16 %v212, %v210
    %v261 = vpack.c.b16 %v215, %v213
    %v262 = vpack.c.b16 %v216, %v214
    %v263 = vpack.c.b16 %v219, %v217
    %v264 = vpack.c.b16 %v220, %v218
    %v265 = vpack.c.b16 %v223, %v221
    %v266 = vpack.c.b16 %v224, %v222
    %v267 = vpack.c.b16 %v227, %v225
    %v268 = vpack.c.b16 %v228, %v226
    %v269 = vpack.c.b16 %v231, %v229
    %v270 = vpack.c.b16 %v232, %v230
    %v271 = vpack.c.b16 %v235, %v233
    %v272 = vpack.c.b16 %v236, %v234
    %v273 = vpack.c.b16 %v239, %v237
    %v274 = vpack.c.b16 %v240, %v238
    %v275 = vpack.c.b16 %v243, %v241
    %v276 = vpack.c.b16 %v244, %v242
    %309 = vmatpush.bf16.msra.mxu0 %v259
    %310 = vmatpush.bf16.msra.mxu0 %v257
    %311 = vmatpush.bf16.msra.mxu0 %v255
    %312 = vmatpush.bf16.msra.mxu0 %v253
    %313 = vmatpush.bf16.msra.mxu0 %v251
    %314 = vmatpush.bf16.msra.mxu0 %v249
    %315 = vmatpush.bf16.msra.mxu0 %v247
    %316 = vmatpush.bf16.msra.mxu0 %v245
    %317 = vmatmul.bf16.gmra.mxu0 %v109
    %v318 = vpop.f32.mrf.mxu0
    %v319 = vadd.f32 %v145, %v318
    %v320 = vpop.f32.mrf.mxu0
    %v321 = vadd.f32 %v145, %v320
    %322 = vdwg.mxu0
    %323 = vmatpush.bf16.msra.mxu0 %v275
    %324 = vmatpush.bf16.msra.mxu0 %v273
    %325 = vmatpush.bf16.msra.mxu0 %v271
    %326 = vmatpush.bf16.msra.mxu0 %v269
    %327 = vmatpush.bf16.msra.mxu0 %v267
    %328 = vmatpush.bf16.msra.mxu0 %v265
    %329 = vmatpush.bf16.msra.mxu0 %v263
    %330 = vmatpush.bf16.msra.mxu0 %v261
    %331 = vmatmul.bf16.gmra.mxu0 %v110
    %v332 = vpop.f32.mrf.mxu0
    %v333 = vadd.f32 %v319, %v332
    %v334 = vpop.f32.mrf.mxu0
    %v335 = vadd.f32 %v321, %v334
    %336 = vdwg.mxu0
    %337 = vmatpush.bf16.msra.mxu0 %v260
    %338 = vmatpush.bf16.msra.mxu0 %v258
    %339 = vmatpush.bf16.msra.mxu0 %v256
    %340 = vmatpush.bf16.msra.mxu0 %v254
    %341 = vmatpush.bf16.msra.mxu0 %v252
    %342 = vmatpush.bf16.msra.mxu0 %v250
    %343 = vmatpush.bf16.msra.mxu0 %v248
    %344 = vmatpush.bf16.msra.mxu0 %v246
    %345 = vmatmul.bf16.gmra.mxu0 %v109
    %v346 = vpop.f32.mrf.mxu0
    %v347 = vadd.f32 %v146, %v346
    %v348 = vpop.f32.mrf.mxu0
    %v349 = vadd.f32 %v146, %v348
    %350 = vdwg.mxu0
    %351 = vmatpush.bf16.msra.mxu0 %v276
    %352 = vmatpush.bf16.msra.mxu0 %v274
    %353 = vmatpush.bf16.msra.mxu0 %v272
    %354 = vmatpush.bf16.msra.mxu0 %v270
    %355 = vmatpush.bf16.msra.mxu0 %v268
    %356 = vmatpush.bf16.msra.mxu0 %v266
    %357 = vmatpush.bf16.msra.mxu0 %v264
    %358 = vmatpush.bf16.msra.mxu0 %v262
    %359 = vmatmul.bf16.gmra.mxu0 %v110
    %v360 = vpop.f32.mrf.mxu0
    %v361 = vadd.f32 %v347, %v360
    %v362 = vpop.f32.mrf.mxu0
    %v363 = vadd.f32 %v349, %v362
    %364 = vdwg.mxu0
    %v365 = vmax.f32 %v333, 0.0
    %v366 = vmax.f32 %v361, 0.0
    %v367 = vmax.f32 %v335, 0.0
    %v368 = vmax.f32 %v363, 0.0
    %v369 = vpack.c.bf16 %v367, %v365
    %v370 = vpack.c.bf16 %v368, %v366
    %v371 = vld [vmem:[%s5] sm:$0xf]
    %v372 = vld [vmem:[%s5 + $0x4] sm:$0xf]
    %v373 = vld [vmem:[%s5 + $0x8] sm:$0xf]
    %v374 = vld [vmem:[%s5 + $0xc] sm:$0xf]
    %v375 = vld [vmem:[%s5 + $0x10] sm:$0xf]
    %v376 = vld [vmem:[%s5 + $0x14] sm:$0xf]
    %v377 = vld [vmem:[%s5 + $0x18] sm:$0xf]
    %v378 = vld [vmem:[%s5 + $0x1c] sm:$0xf]
    %v379 = vld [vmem:[%s5 + $0x20] sm:$0xf]
    %v380 = vld [vmem:[%s5 + $0x24] sm:$0xf]
    %v381 = vld [vmem:[%s5 + $0x28] sm:$0xf]
    %v382 = vld [vmem:[%s5 + $0x2c] sm:$0xf]
    %v383 = vld [vmem:[%s5 + $0x30] sm:$0xf]
    %v384 = vld [vmem:[%s5 + $0x34] sm:$0xf]
    %v385 = vld [vmem:[%s5 + $0x38] sm:$0xf]
    %v386 = vld [vmem:[%s5 + $0x3c] sm:$0xf]
    %v387 = vld [vmem:[%s5 + $0x40] sm:$0xf]
    %v388 = vld [vmem:[%s5 + $0x44] sm:$0xf]
    %v389 = vld [vmem:[%s5 + $0x48] sm:$0xf]
    %v390 = vld [vmem:[%s5 + $0x4c] sm:$0xf]
    %v391 = vld [vmem:[%s5 + $0x50] sm:$0xf]
    %v392 = vld [vmem:[%s5 + $0x54] sm:$0xf]
    %v393 = vld [vmem:[%s5 + $0x58] sm:$0xf]
    %v394 = vld [vmem:[%s5 + $0x5c] sm:$0xf]
    %v395 = vld [vmem:[%s5 + $0x60] sm:$0xf]
    %v396 = vld [vmem:[%s5 + $0x64] sm:$0xf]
    %v397 = vld [vmem:[%s5 + $0x68] sm:$0xf]
    %v398 = vld [vmem:[%s5 + $0x6c] sm:$0xf]
    %v399 = vld [vmem:[%s5 + $0x70] sm:$0xf]
    %v400 = vld [vmem:[%s5 + $0x74] sm:$0xf]
    %v401 = vld [vmem:[%s5 + $0x78] sm:$0xf]
    %v402 = vld [vmem:[%s5 + $0x7c] sm:$0xf]
    %v403 = vld [vmem:[%s6] sm:$0x1]
    %v405 = vperm.slane %v403, 0
    %v439 = vunpack.c.l.b16 %v371
    %v440 = vunpack.c.l.b16 %v372
    %v441 = vunpack.c.l.b16 %v373
    %v442 = vunpack.c.l.b16 %v374
    %v443 = vunpack.c.l.b16 %v375
    %v444 = vunpack.c.l.b16 %v376
    %v445 = vunpack.c.l.b16 %v377
    %v446 = vunpack.c.l.b16 %v378
    %v447 = vunpack.c.l.b16 %v379
    %v448 = vunpack.c.l.b16 %v380
    %v449 = vunpack.c.l.b16 %v381
    %v450 = vunpack.c.l.b16 %v382
    %v451 = vunpack.c.l.b16 %v383
    %v452 = vunpack.c.l.b16 %v384
    %v453 = vunpack.c.l.b16 %v385
    %v454 = vunpack.c.l.b16 %v386
    %v455 = vunpack.c.l.b16 %v387
    %v456 = vunpack.c.l.b16 %v388
    %v457 = vunpack.c.l.b16 %v389
    %v458 = vunpack.c.l.b16 %v390
    %v459 = vunpack.c.l.b16 %v391
    %v460 = vunpack.c.l.b16 %v392
    %v461 = vunpack.c.l.b16 %v393
    %v462 = vunpack.c.l.b16 %v394
    %v463 = vunpack.c.l.b16 %v395
    %v464 = vunpack.c.l.b16 %v396
    %v465 = vunpack.c.l.b16 %v397
    %v466 = vunpack.c.l.b16 %v398
    %v467 = vunpack.c.l.b16 %v399
    %v468 = vunpack.c.l.b16 %v400
    %v469 = vunpack.c.l.b16 %v401
    %v470 = vunpack.c.l.b16 %v402
    %v471 = vpack.c.b16 %v440, %v439
    %v472 = vpack.c.b16 %v442, %v441
    %v473 = vpack.c.b16 %v444, %v443
    %v474 = vpack.c.b16 %v446, %v445
    %v475 = vpack.c.b16 %v448, %v447
    %v476 = vpack.c.b16 %v450, %v449
    %v477 = vpack.c.b16 %v452, %v451
    %v478 = vpack.c.b16 %v454, %v453
    %v479 = vpack.c.b16 %v456, %v455
    %v480 = vpack.c.b16 %v458, %v457
    %v481 = vpack.c.b16 %v460, %v459
    %v482 = vpack.c.b16 %v462, %v461
    %v483 = vpack.c.b16 %v464, %v463
    %v484 = vpack.c.b16 %v466, %v465
    %v485 = vpack.c.b16 %v468, %v467
    %v486 = vpack.c.b16 %v470, %v469
    %503 = vmatpush.bf16.msra.mxu0 %v478
    %504 = vmatpush.bf16.msra.mxu0 %v477
    %505 = vmatpush.bf16.msra.mxu0 %v476
    %506 = vmatpush.bf16.msra.mxu0 %v475
    %507 = vmatpush.bf16.msra.mxu0 %v474
    %508 = vmatpush.bf16.msra.mxu0 %v473
    %509 = vmatpush.bf16.msra.mxu0 %v472
    %510 = vmatpush.bf16.msra.mxu0 %v471
    %511 = vmatmul.bf16.gmra.mxu0 %v369
    %v512 = vpop.f32.mrf.mxu0
    %v513 = vadd.f32 %v405, %v512
    %v514 = vpop.f32.mrf.mxu0
    %v515 = vadd.f32 %v405, %v514
    %516 = vdwg.mxu0
    %517 = vmatpush.bf16.msra.mxu0 %v486
    %518 = vmatpush.bf16.msra.mxu0 %v485
    %519 = vmatpush.bf16.msra.mxu0 %v484
    %520 = vmatpush.bf16.msra.mxu0 %v483
    %521 = vmatpush.bf16.msra.mxu0 %v482
    %522 = vmatpush.bf16.msra.mxu0 %v481
    %523 = vmatpush.bf16.msra.mxu0 %v480
    %524 = vmatpush.bf16.msra.mxu0 %v479
    %525 = vmatmul.bf16.gmra.mxu0 %v370
    %v526 = vpop.f32.mrf.mxu0
    %v527 = vadd.f32 %v513, %v526
    %v528 = vpop.f32.mrf.mxu0
    %v529 = vadd.f32 %v515, %v528
    %530 = vdwg.mxu0
    %vm531 = vcmask 64512
    %532 = vst.msk [vmem:[#allocation5] sm:$0xff] %vm531, %v527
    %533 = vst.msk [vmem:[#allocation5 + $0x8] sm:$0xff] %vm531, %v529
    // Predicated region
    $region34: #{tpu_custom_call.1} parent=1 // pred_check
      _
    $region35: #{tpu_custom_call.1} parent=1 // pred_check_branch
      %535 = sbr.rel (0) target = $region37
    $region36: #{tpu_custom_call.1} parent=1 // pred_region
      %537 = vsyncadd [#allocation4], 224
      %s538 = sshll.u32 [#allocation5], 4
      %s539 = int_to_ptr.vmem [resolvable:$true] %s538
      %s540 = sshll.u32 %s7, 4
      %s541 = int_to_ptr.hbm [resolvable:$true] %s540
      %546 = dma.vmem_to_hbm [thread:$0]  %s539, 32, %s541, [#allocation4], 32, 32, 2
    $region37: #{tpu_custom_call.1} parent=1 // pred_fallthru
      _
    // Predicated region
    $region38: #{tpu_custom_call.1} parent=1 // pred_check
      _
    $region39: #{tpu_custom_call.1} parent=1 // pred_check_branch
      %548 = sbr.rel (0) target = $region41
    $region40: #{tpu_custom_call.1} parent=1 // pred_region
      %550 = dma.done [#allocation4], 256
    $region41: #{tpu_custom_call.1} parent=1 // pred_fallthru
      _
    %551 = vsyncpa [#allocation3], 1
    %552 = vsyncpa [#allocation4], 1

</llo_original>
